<compile_context>
chip_gen: v7x
topology: tpu7x:2x2x1
jax: 0.10.0
libtpu: 0.0.40
codegen_flags: <defaults>
</compile_context>

<pallas_src>
import functools

import jax
import jax.numpy as jnp
from jax import lax
from jax.experimental import pallas as pl
from jax.experimental.pallas import tpu as pltpu

LANE = 128
SUBLANE = 8


def _l2_norm_partial_kernel(pred_ref, label_ref, part_ref, *,
                            n_valid, m_valid, mask_n, mask_m, unroll_c):
    """One grid step: partial sum of per-pixel channel-L2 norms for this block.

    pred_ref / label_ref : (tile_n, C, tile_m, 128) block of the (N, C, M, 128) view.
    part_ref             : resident (8, 128) f32 partial-sum block (one per sample-block).
    """
    tile_n, C, tile_m, _ = pred_ref.shape
    ni = pl.program_id(0)
    mi = pl.program_id(1)

    @pl.when(mi == 0)
    def _init():
        part_ref[...] = jnp.zeros_like(part_ref)

    if unroll_c:
        # One f32 slab live at a time -> temporaries bounded regardless of C / input dtype.
        sq = jnp.zeros((tile_n, tile_m, LANE), jnp.float32)
        for c in range(C):                    # static unroll; channel reduce = VPU slab adds
            d = (pred_ref[:, c, :, :].astype(jnp.float32)
                 - label_ref[:, c, :, :].astype(jnp.float32))
            sq = sq + d * d
    else:
        d = pred_ref[...].astype(jnp.float32) - label_ref[...].astype(jnp.float32)
        sq = jnp.sum(d * d, axis=1)           # non-minor axis -> still pure VPU slab adds

    dist = jnp.sqrt(sq)                       # (tile_n, tile_m, 128); EUP slot, free under DMA

    # In-kernel masking of tile overhang (replaces wrapper-side jnp.pad of both tensors).
    if mask_n or mask_m:
        ok = None
        if mask_m:
            m_idx = mi * tile_m + lax.broadcasted_iota(
                jnp.int32, (tile_n, tile_m, LANE), 1)
            ok = m_idx < m_valid
        if mask_n:
            n_idx = ni * tile_n + lax.broadcasted_iota(
                jnp.int32, (tile_n, tile_m, LANE), 0)
            ok_n = n_idx < n_valid
            ok = ok_n if ok is None else jnp.logical_and(ok, ok_n)
        dist = jnp.where(ok, dist, 0.0)       # garbage in OOB rows is zeroed before accumulate

    # Fold the block's distances into the resident (8, 128) partial (vreg-wise VPU adds).
    rows = tile_n * tile_m
    flat = dist.reshape(rows, LANE)
    pad_rows = (-rows) % SUBLANE
    if pad_rows:                              # tiny blocks only; adds exact zeros
        flat = jnp.concatenate(
            [flat, jnp.zeros((pad_rows, LANE), jnp.float32)], axis=0)
    part_ref[...] += jnp.sum(flat.reshape(-1, SUBLANE, LANE), axis=0)


def mse_loss(pred, label, *, target_block_bytes=8 * 1024 * 1024):
    """pred, label: (N, C, H, W). Returns f32 scalar = mean_{n,h,w} sqrt(sum_c (pred-label)^2)."""
    assert pred.shape == label.shape and pred.ndim == 4
    N, C, H, W = pred.shape
    HW = H * W
    total_pix = N * HW
    itemsize = jnp.dtype(pred.dtype).itemsize

    # Native NCHW layout: (N, C, HW) and (N, C, M, 128) are free reshapes, so the kernel
    # streams each input exactly once from HBM (no transpose pass, no layout copy).
    lane_pad = (-HW) % LANE
    p = pred.reshape(N, C, HW)
    l = label.reshape(N, C, HW)
    if lane_pad:
        # TODO(synk): H*W % 128 != 0 still costs one jnp.pad pass over both inputs; a fully
        # fused variant would mask partial lanes in-kernel on an (N, C, HW) layout instead.
        p = jnp.pad(p, ((0, 0), (0, 0), (0, lane_pad)))
        l = jnp.pad(l, ((0, 0), (0, 0), (0, lane_pad)))
    M = (HW + lane_pad) // LANE
    p = p.reshape(N, C, M, LANE)
    l = l.reshape(N, C, M, LANE)

    # --- tile selection: big blocks (less per-step overhead) under an explicit VMEM budget ---
    unroll_c = C <= 128
    # TODO(synk): very large C should also tile the channel axis (two-stage reduction before
    # the sqrt); typical image channel counts fit in one block dim.
    row_in_bytes = C * LANE * itemsize                         # one pixel-row, one input
    row_vmem_bytes = 4 * row_in_bytes + (                      # 2 inputs x 2 pipeline buffers
        4 * LANE * 4 if unroll_c                               # + bounded f32 slabs (loop path)
        else 2 * C * LANE * 4 + 2 * LANE * 4)                  # + full f32 block temps
    vmem_budget = 44 * 1024 * 1024                             # headroom under v7x 64 MiB VMEM
    rows_budget = max(1, min(target_block_bytes // max(1, row_in_bytes),
                             vmem_budget // max(1, row_vmem_bytes)))
    if rows_budget >= M:
        tile_m = M                                             # full dim -> always layout-legal
        tile_n = int(max(1, min(N, rows_budget // M)))
    else:
        tile_n = 1
        tile_m = (rows_budget // SUBLANE) * SUBLANE            # multiple of 8 -> layout-legal
        if tile_m == 0:
            tile_m = min(SUBLANE, M)

    n_blocks = pl.cdiv(N, tile_n)
    m_blocks = pl.cdiv(M, tile_m)
    mask_n = (N % tile_n) != 0
    mask_m = (M % tile_m) != 0

    # VMEM limit from the actual tiles: double-buffered inputs + f32 temporaries + partials.
    block_in_bytes = tile_n * C * tile_m * LANE * itemsize
    slab_f32 = tile_n * tile_m * LANE * 4
    temp_bytes = (4 * slab_f32 if unroll_c
                  else 2 * tile_n * C * tile_m * LANE * 4 + 2 * slab_f32)
    vmem_needed = 4 * block_in_bytes + temp_bytes + 2 * SUBLANE * LANE * 4 + (2 << 20)
    vmem_limit = int(min(max(vmem_needed, 24 << 20), 56 << 20))   # <= v7x 64 MiB physical

    kernel = functools.partial(
        _l2_norm_partial_kernel,
        n_valid=N, m_valid=M, mask_n=mask_n, mask_m=mask_m, unroll_c=unroll_c)

    # TODO(synk): on v7x, a leading pltpu.CORE_PARALLEL axis over the sample-blocks would
    # explicitly shard HBM streaming across both TensorCores; kept on the portable
    # ("parallel", "arbitrary") semantics here so the kernel lowers on every generation.
    partials = pl.pallas_call(
        kernel,
        out_shape=jax.ShapeDtypeStruct((n_blocks * SUBLANE, LANE), jnp.float32),
        grid=(n_blocks, m_blocks),
        in_specs=[
            pl.BlockSpec((tile_n, C, tile_m, LANE), lambda ni, mi: (ni, 0, mi, 0)),
            pl.BlockSpec((tile_n, C, tile_m, LANE), lambda ni, mi: (ni, 0, mi, 0)),
        ],
        out_specs=pl.BlockSpec((SUBLANE, LANE), lambda ni, mi: (ni, 0)),
        compiler_params=pltpu.CompilerParams(
            dimension_semantics=("parallel", "arbitrary"),
            vmem_limit_bytes=vmem_limit,
        ),
        cost_estimate=pl.CostEstimate(
            flops=3 * N * C * HW + N * HW,
            transcendentals=N * HW,
            bytes_accessed=2 * N * C * HW * itemsize + n_blocks * SUBLANE * LANE * 4,
        ),
    )(p, l)

    # One tiny cross-lane/sublane reduce + exact scale by the TRUE pixel count (masked /
    # padded elements contributed exactly 0), executed once outside the hot loop.
    return jnp.sum(partials) * jnp.float32(1.0 / total_pix)


if __name__ == "__main__":
    key = jax.random.PRNGKey(0)
    k1, k2 = jax.random.split(key)

    N, C, H, W = 2, 4, 16, 16
    pred = jax.random.normal(k1, (N, C, H, W), dtype=jnp.float32)
    label = jax.random.normal(k2, (N, C, H, W), dtype=jnp.float32)

    loss = jax.jit(mse_loss)(pred, label)
    loss = jax.block_until_ready(loss)

    # Pure-JAX reference of the PyTorch module's forward.
    ref = jnp.mean(jnp.sqrt(jnp.sum((pred - label) ** 2, axis=1)))
    assert jnp.allclose(loss, ref, rtol=1e-5, atol=1e-5), (loss, ref)

    print("KERNEL_OK")
</pallas_src>

<mosaic_0001>
module attributes {stable_mosaic.version = 11 : i64} {
  func.func @_l2_norm_partial_kernel(%arg0: i32, %arg1: i32, %arg2: memref<2x4x2x128xf32, #tpu.memory_space<vmem>>, %arg3: memref<2x4x2x128xf32, #tpu.memory_space<vmem>>, %arg4: memref<8x128xf32, #tpu.memory_space<vmem>>) attributes {dimension_semantics = [#tpu.dimension_semantics<parallel>, #tpu.dimension_semantics<arbitrary>], iteration_bounds = array<i64: 1, 1>, scalar_prefetch = 0 : i64, scratch_operands = 0 : i64, tpu.core_type = #tpu.core_type<tc>, window_params = [{transform_indices = @transform_0, window_bounds = array<i64: 2, 4, 2, 128>}, {transform_indices = @transform_1, window_bounds = array<i64: 2, 4, 2, 128>}, {transform_indices = @transform_2, window_bounds = array<i64: 8, 128>}]} {
    %c0_i32 = arith.constant 0 : i32
    %0 = arith.cmpi eq, %arg1, %c0_i32 : i32
    %1 = arith.extui %0 : i1 to i32
    %c0_i32_0 = arith.constant 0 : i32
    %2 = arith.cmpi ne, %1, %c0_i32_0 : i32
    scf.if %2 {
      %cst_35 = arith.constant 0.000000e+00 : f32
      %41 = vector.broadcast %cst_35 : f32 to vector<8x128xf32>
      %c0_36 = arith.constant 0 : index
      %c0_37 = arith.constant 0 : index
      %42 = vector.load %arg4[%c0_36, %c0_37] : memref<8x128xf32, #tpu.memory_space<vmem>>, vector<8x128xf32>
      tpu.vector_store %arg4[%c0_36, %c0_37], %41 {strides = array<i32>} : memref<8x128xf32, #tpu.memory_space<vmem>>, vector<8x128xf32>,
    } else {
    }
    %cst = arith.constant 0.000000e+00 : f32
    %3 = vector.broadcast %cst : f32 to vector<2x2x128xf32>
    %c0 = arith.constant 0 : index
    %c0_1 = arith.constant 0 : index
    %c0_2 = arith.constant 0 : index
    %c0_3 = arith.constant 0 : index
    %4 = vector.load %arg2[%c0, %c0_1, %c0_2, %c0_3] : memref<2x4x2x128xf32, #tpu.memory_space<vmem>>, vector<2x1x2x128xf32>
    %5 = vector.shape_cast %4 : vector<2x1x2x128xf32> to vector<2x2x128xf32>
    %c0_4 = arith.constant 0 : index
    %c0_5 = arith.constant 0 : index
    %c0_6 = arith.constant 0 : index
    %c0_7 = arith.constant 0 : index
    %6 = vector.load %arg3[%c0_4, %c0_5, %c0_6, %c0_7] : memref<2x4x2x128xf32, #tpu.memory_space<vmem>>, vector<2x1x2x128xf32>
    %7 = vector.shape_cast %6 : vector<2x1x2x128xf32> to vector<2x2x128xf32>
    %8 = arith.subf %5, %7 : vector<2x2x128xf32>
    %9 = arith.mulf %8, %8 : vector<2x2x128xf32>
    %10 = arith.addf %3, %9 : vector<2x2x128xf32>
    %c0_8 = arith.constant 0 : index
    %c1 = arith.constant 1 : index
    %c0_9 = arith.constant 0 : index
    %c0_10 = arith.constant 0 : index
    %11 = vector.load %arg2[%c0_8, %c1, %c0_9, %c0_10] : memref<2x4x2x128xf32, #tpu.memory_space<vmem>>, vector<2x1x2x128xf32>
    %12 = vector.shape_cast %11 : vector<2x1x2x128xf32> to vector<2x2x128xf32>
    %c0_11 = arith.constant 0 : index
    %c1_12 = arith.constant 1 : index
    %c0_13 = arith.constant 0 : index
    %c0_14 = arith.constant 0 : index
    %13 = vector.load %arg3[%c0_11, %c1_12, %c0_13, %c0_14] : memref<2x4x2x128xf32, #tpu.memory_space<vmem>>, vector<2x1x2x128xf32>
    %14 = vector.shape_cast %13 : vector<2x1x2x128xf32> to vector<2x2x128xf32>
    %15 = arith.subf %12, %14 : vector<2x2x128xf32>
    %16 = arith.mulf %15, %15 : vector<2x2x128xf32>
    %17 = arith.addf %10, %16 : vector<2x2x128xf32>
    %c0_15 = arith.constant 0 : index
    %c2 = arith.constant 2 : index
    %c0_16 = arith.constant 0 : index
    %c0_17 = arith.constant 0 : index
    %18 = vector.load %arg2[%c0_15, %c2, %c0_16, %c0_17] : memref<2x4x2x128xf32, #tpu.memory_space<vmem>>, vector<2x1x2x128xf32>
    %19 = vector.shape_cast %18 : vector<2x1x2x128xf32> to vector<2x2x128xf32>
    %c0_18 = arith.constant 0 : index
    %c2_19 = arith.constant 2 : index
    %c0_20 = arith.constant 0 : index
    %c0_21 = arith.constant 0 : index
    %20 = vector.load %arg3[%c0_18, %c2_19, %c0_20, %c0_21] : memref<2x4x2x128xf32, #tpu.memory_space<vmem>>, vector<2x1x2x128xf32>
    %21 = vector.shape_cast %20 : vector<2x1x2x128xf32> to vector<2x2x128xf32>
    %22 = arith.subf %19, %21 : vector<2x2x128xf32>
    %23 = arith.mulf %22, %22 : vector<2x2x128xf32>
    %24 = arith.addf %17, %23 : vector<2x2x128xf32>
    %c0_22 = arith.constant 0 : index
    %c3 = arith.constant 3 : index
    %c0_23 = arith.constant 0 : index
    %c0_24 = arith.constant 0 : index
    %25 = vector.load %arg2[%c0_22, %c3, %c0_23, %c0_24] : memref<2x4x2x128xf32, #tpu.memory_space<vmem>>, vector<2x1x2x128xf32>
    %26 = vector.shape_cast %25 : vector<2x1x2x128xf32> to vector<2x2x128xf32>
    %c0_25 = arith.constant 0 : index
    %c3_26 = arith.constant 3 : index
    %c0_27 = arith.constant 0 : index
    %c0_28 = arith.constant 0 : index
    %27 = vector.load %arg3[%c0_25, %c3_26, %c0_27, %c0_28] : memref<2x4x2x128xf32, #tpu.memory_space<vmem>>, vector<2x1x2x128xf32>
    %28 = vector.shape_cast %27 : vector<2x1x2x128xf32> to vector<2x2x128xf32>
    %29 = arith.subf %26, %28 : vector<2x2x128xf32>
    %30 = arith.mulf %29, %29 : vector<2x2x128xf32>
    %31 = arith.addf %24, %30 : vector<2x2x128xf32>
    %32 = math.sqrt %31 : vector<2x2x128xf32>
    %33 = vector.shape_cast %32 : vector<2x2x128xf32> to vector<4x128xf32>
    %cst_29 = arith.constant 0.000000e+00 : f32
    %34 = vector.broadcast %cst_29 : f32 to vector<4x128xf32>
    %35 = tpu.concatenate %33, %34 in 0 : vector<4x128xf32>, vector<4x128xf32> -> vector<8x128xf32>
    %c0_30 = arith.constant 0 : index
    %c0_31 = arith.constant 0 : index
    %36 = vector.load %arg4[%c0_30, %c0_31] : memref<8x128xf32, #tpu.memory_space<vmem>>, vector<8x128xf32>
    %37 = vector.shape_cast %35 : vector<8x128xf32> to vector<1x8x128xf32>
    %cst_32 = arith.constant dense<0.000000e+00> : vector<8x128xf32>
    %38 = vector.multi_reduction <add>, %37, %cst_32 [0] : vector<1x8x128xf32> to vector<8x128xf32>
    %39 = arith.addf %36, %38 : vector<8x128xf32>
    %c0_33 = arith.constant 0 : index
    %c0_34 = arith.constant 0 : index
    %40 = vector.load %arg4[%c0_33, %c0_34] : memref<8x128xf32, #tpu.memory_space<vmem>>, vector<8x128xf32>
    tpu.vector_store %arg4[%c0_33, %c0_34], %39 {strides = array<i32>} : memref<8x128xf32, #tpu.memory_space<vmem>>, vector<8x128xf32>,
    return
  }
  func.func @transform_0(%arg0: i32, %arg1: i32) -> (i32, i32, i32, i32) {
    %c0_i32 = arith.constant 0 : i32
    %c0_i32_0 = arith.constant 0 : i32
    %c0_i32_1 = arith.constant 0 : i32
    return %arg0, %c0_i32, %arg1, %c0_i32_0 : i32, i32, i32, i32
  }
  func.func @transform_1(%arg0: i32, %arg1: i32) -> (i32, i32, i32, i32) {
    %c0_i32 = arith.constant 0 : i32
    %c0_i32_0 = arith.constant 0 : i32
    %c0_i32_1 = arith.constant 0 : i32
    return %arg0, %c0_i32, %arg1, %c0_i32_0 : i32, i32, i32, i32
  }
  func.func @transform_2(%arg0: i32, %arg1: i32) -> (i32, i32) {
    %c0_i32 = arith.constant 0 : i32
    %c0_i32_0 = arith.constant 0 : i32
    return %arg0, %c0_i32 : i32, i32
  }
}

</mosaic_0001>

<llo_original>
// kernel: mse_loss.1
$region0: #{mse_loss.1}
  #allocation0 [shape = 'u32[]', space=smem, size = 0x4, offset = 0x4, fixed_abs, tag = 'smem constant byte address 0x4 - core index']
  #allocation1 [shape = 'u32[144,128]{1,0:T(1,128)}', space=vmem, size = 0x12000, scoped, tag = 'internal scratch']
  %s0 = inlined_call_operand.vmem [shape: f32[2,4,2,128], index: 0, kind: input, shape index: {}]
  %s1 = inlined_call_operand.vmem [shape: f32[2,4,2,128], index: 1, kind: input, shape index: {}]
  %s2 = inlined_call_operand.vmem [shape: f32[8,128], index: 2, kind: output, shape index: {}]
  %s3 = sld [smem:[#allocation0]]
  $region22: #{mse_loss.1} parent=0
    _
  %s5 = ssub.s32 1, %s3
  %s6 = scalar_select 0, %s5, %s3
  // Predicated region
  $region2: #{mse_loss.1} parent=0 // pred_check
    _
  $region3: #{mse_loss.1} parent=0 // pred_check_branch
    %8 = sbr.rel (0) target = $region5
  $region4: #{mse_loss.1} parent=0 // pred_region
    _
  $region5: #{mse_loss.1} parent=0 // pred_fallthru
    _
  // Predicated region
  $region6: #{mse_loss.1} parent=0 // pred_check
    _
  $region7: #{mse_loss.1} parent=0 // pred_check_branch
    %10 = sbr.rel (0) target = $region9
  $region8: #{mse_loss.1} parent=0 // pred_region
    _
  $region9: #{mse_loss.1} parent=0 // pred_fallthru
    _
  %p11 = scmp.eq.s32.totalorder 0, 0
  // Predicated region
  $region10: #{mse_loss.1} parent=0 // pred_check
    %p12 = pneg %p11
  $region11: #{mse_loss.1} parent=0 // pred_check_branch
    %14 = sbr.rel (%p12) target = $region13
  $region12: #{mse_loss.1} parent=0 // pred_region
    %15 = vst [vmem:[%s2] sm:$0xff] 0.0
  $region13: #{mse_loss.1} parent=0 // pred_fallthru
    _
  %v16 = vld [vmem:[%s0] sm:$0x3]
  %v17 = vld [vmem:[%s0 + $0x8] sm:$0x3]
  %v18 = vld [vmem:[%s1] sm:$0x3]
  %v19 = vld [vmem:[%s1 + $0x8] sm:$0x3]
  %v20 = vsub.f32 %v16, %v18
  %v21 = vsub.f32 %v17, %v19
  %v22 = vmul.f32 %v20, %v20
  %v23 = vmul.f32 %v21, %v21
  %v24 = vadd.f32 %v22, 0.0
  %v25 = vadd.f32 %v23, 0.0
  %s26 = scalar_lea.vmem %s0, 2
  %v27 = vld [vmem:[%s26] sm:$0x3]
  %v28 = vld [vmem:[%s26 + $0x8] sm:$0x3]
  %s29 = scalar_lea.vmem %s1, 2
  %v30 = vld [vmem:[%s29] sm:$0x3]
  %v31 = vld [vmem:[%s29 + $0x8] sm:$0x3]
  %v32 = vsub.f32 %v27, %v30
  %v33 = vsub.f32 %v28, %v31
  %v34 = vmul.f32 %v32, %v32
  %v35 = vmul.f32 %v33, %v33
  %v36 = vadd.f32 %v24, %v34
  %v37 = vadd.f32 %v25, %v35
  %s38 = scalar_lea.vmem %s0, 4
  %v39 = vld [vmem:[%s38] sm:$0x3]
  %v40 = vld [vmem:[%s38 + $0x8] sm:$0x3]
  %s41 = scalar_lea.vmem %s1, 4
  %v42 = vld [vmem:[%s41] sm:$0x3]
  %v43 = vld [vmem:[%s41 + $0x8] sm:$0x3]
  %v44 = vsub.f32 %v39, %v42
  %v45 = vsub.f32 %v40, %v43
  %v46 = vmul.f32 %v44, %v44
  %v47 = vmul.f32 %v45, %v45
  %v48 = vadd.f32 %v36, %v46
  %v49 = vadd.f32 %v37, %v47
  %s50 = scalar_lea.vmem %s0, 6
  %v51 = vld [vmem:[%s50] sm:$0x3]
  %v52 = vld [vmem:[%s50 + $0x8] sm:$0x3]
  %s53 = scalar_lea.vmem %s1, 6
  %v54 = vld [vmem:[%s53] sm:$0x3]
  %v55 = vld [vmem:[%s53 + $0x8] sm:$0x3]
  %v56 = vsub.f32 %v51, %v54
  %v57 = vsub.f32 %v52, %v55
  %v58 = vmul.f32 %v56, %v56
  %v59 = vmul.f32 %v57, %v57
  %v60 = vadd.f32 %v48, %v58
  %v61 = vadd.f32 %v49, %v59
  %v62 = vrsqrt.pop %v60
  %v63 = vmul.f32 %v60, %v62
  %vm64 = vcmp.eq.f32.partialorder %v60, inf
  %v65 = vsel %vm64, %v60, %v63
  %vm66 = vcmp.eq.f32.partialorder %v60, 0.0
  %v67 = vand.u32 %v60, 2147483648
  %v68 = vsel %vm66, %v67, %v65
  %v69 = vrsqrt.pop %v61
  %v70 = vmul.f32 %v61, %v69
  %vm71 = vcmp.eq.f32.partialorder %v61, inf
  %v72 = vsel %vm71, %v61, %v70
  %vm73 = vcmp.eq.f32.partialorder %v61, 0.0
  %v74 = vand.u32 %v61, 2147483648
  %v75 = vsel %vm73, %v74, %v72
  %v78 = vcombine.low %v68, %v75
  %v80 = vunpack.c.l.s4 1983009808
  %v81 = vunpack.c.0.s8 %v80
  %v82 = vlaneseq
  %v83 = vshrl.u32 %v82, 7
  %v84 = vsub.s32 %v81, %v83
  %v85 = vrot.slane %v78, %v84
  %vm87 = vcmask 1043456
  %v88 = vsel %vm87, %v85, 0.0
  %v89 = vld [vmem:[%s2] sm:$0xff]
  %v90 = vadd.f32 %v88, 0.0
  %v91 = vadd.f32 %v89, %v90
  %92 = vst [vmem:[%s2] sm:$0xff] %v91
  // Predicated region
  $region14: #{mse_loss.1} parent=0 // pred_check
    _
  $region15: #{mse_loss.1} parent=0 // pred_check_branch
    %94 = sbr.rel (0) target = $region17
  $region16: #{mse_loss.1} parent=0 // pred_region
    _
  $region17: #{mse_loss.1} parent=0 // pred_fallthru
    _
  // Predicated region
  $region18: #{mse_loss.1} parent=0 // pred_check
    _
  $region19: #{mse_loss.1} parent=0 // pred_check_branch
    %96 = sbr.rel (0) target = $region21
  $region20: #{mse_loss.1} parent=0 // pred_region
    _
  $region21: #{mse_loss.1} parent=0 // pred_fallthru
    _

</llo_original>
